<compile_context>
chip_gen: v7x
topology: tpu7x:2x2x1
jax: 0.10.0
libtpu: 0.0.40
codegen_flags: <defaults>
</compile_context>

<pallas_src>
import functools

import jax
import jax.numpy as jnp
from jax.experimental import pallas as pl
from jax.experimental.pallas import tpu as pltpu

POS_MARGIN = 0.2   # PairMarginMiner default
NEG_MARGIN = 0.8   # PairMarginMiner default


def _pair_margin_miner_kernel(er_ref, ec_ref, lr_ref, lc_ref, *out_refs,
                              tile, include_dist, ec_resident, dist_dtype):
    i = pl.program_id(0)
    j = pl.program_id(1)

    if include_dist:
        dist_ref, bits_ref = out_refs
    else:
        (bits_ref,) = out_refs

    # Row block of normalized embeddings (tile, D); column block either sliced out
    # of the VMEM-resident full matrix or delivered tiled by BlockSpec.
    er = er_ref[...]
    if ec_resident:
        col0 = pl.multiple_of(j * tile, tile)
        ec = ec_ref[pl.ds(col0, tile), :]
    else:
        ec = ec_ref[...]

    # Row labels sliced from the VMEM-resident (Np, 1) vector; column labels are a
    # tiny (1, tile) tiled block.
    row0 = pl.multiple_of(i * tile, tile)
    lr = lr_ref[pl.ds(row0, tile), :]          # (tile, 1) int32
    lc = lc_ref[...]                           # (1, tile) int32

    # MXU matmul (bf16 in / f32 accumulate on the fast path).
    dots = jax.lax.dot_general(er, ec, (((1,), (1,)), ((), ())),
                               preferred_element_type=jnp.float32)   # (tile, tile)

    # Unit-norm rows => squared L2 distance is 2 - 2*dot (no row/col norm terms).
    dsq = jnp.maximum(2.0 - 2.0 * dots, 0.0)

    same = lr == lc                                                  # (tile, tile)

    # PairMarginMiner thresholds on the squared distance (sqrt-free masks).
    pos = jnp.logical_and(same, dsq > POS_MARGIN * POS_MARGIN)
    neg = jnp.logical_and(jnp.logical_not(same), dsq < NEG_MARGIN * NEG_MARGIN)

    # Pack both masks into one int8 stream: bit0 = pos, bit1 = neg.
    bits_ref[...] = (pos.astype(jnp.int32) | (neg.astype(jnp.int32) << 1)).astype(jnp.int8)

    if include_dist:
        dist = jnp.sqrt(dsq)                    # LpDistance power=1
        dist_ref[...] = dist.astype(dist_dtype)

    # Diagonal exclusion only matters on tiles the diagonal crosses (tm == tn).
    @pl.when(i == j)
    def _():
        rid = jax.lax.broadcasted_iota(jnp.int32, (tile, tile), 0)
        cid = jax.lax.broadcasted_iota(jnp.int32, (tile, tile), 1)
        diag = rid == cid
        pos_nd = jnp.logical_and(pos, jnp.logical_not(diag))
        bits_ref[...] = (pos_nd.astype(jnp.int32)
                         | (neg.astype(jnp.int32) << 1)).astype(jnp.int8)
        if include_dist:
            # Self-distance is exactly 0 (bf16 dot of a row with itself is noisy).
            dist_ref[...] = jnp.where(diag, 0.0, dist).astype(dist_dtype)


def unpack_pair_masks(bits):
    """Split the packed int8 mask into (pos_mask, neg_mask) int8 arrays."""
    pos = (bits & 1).astype(jnp.int8)
    neg = ((bits >> 1) & 1).astype(jnp.int8)
    return pos, neg


def pair_margin_miner(embeddings, labels, *, tile=256, include_dist=False,
                      dist_dtype=jnp.bfloat16, compute_dtype=jnp.bfloat16):
    """Pallas PairMarginMiner over the gathered batch.

    embeddings: (N, D) float, labels: (N,) int.
    Returns packed int8 mined-pair mask (N, N) [bit0=pos, bit1=neg]; when
    include_dist=True, returns (dist (N,N) dist_dtype, packed_mask).
    """
    N, D = embeddings.shape
    requested_tile = tile

    # Hoisted L2 normalization (done once, not per grid step).
    emb = embeddings.astype(jnp.float32)
    emb_n = emb * jax.lax.rsqrt(
        jnp.maximum(jnp.sum(emb * emb, axis=-1, keepdims=True), 1e-12))
    emb_c = emb_n.astype(compute_dtype)

    # Pad the gathered batch to a multiple of 128 (lane-dense), then pick the
    # largest square tile <= requested that divides Np while keeping >= 2 row
    # blocks (v7x has 2 TensorCores).
    Np = -(-N // 128) * 128
    tile = 128
    for cand in (512, 256):
        if cand <= requested_tile and Np % cand == 0 and Np // cand >= 2:
            tile = cand
            break

    pad = Np - N
    emb_c = jnp.pad(emb_c, ((0, pad), (0, 0)))
    labels_p = jnp.pad(labels.astype(jnp.int32), (0, pad), constant_values=-1)
    labels_row = labels_p.reshape(Np, 1)
    labels_col = labels_p.reshape(1, Np)

    itemsize = jnp.dtype(compute_dtype).itemsize
    # Keep the whole column-side embedding matrix VMEM-resident when small enough
    # (conservative: raw <= 8 MiB => <= ~16 MiB buffered; safe for v7x's 64 MiB).
    ec_resident = (Np * D * itemsize) <= (8 * 1024 * 1024)

    in_specs = [pl.BlockSpec((tile, D), lambda i, j: (i, 0))]          # row emb block
    if ec_resident:
        in_specs.append(pl.BlockSpec((Np, D), lambda i, j: (0, 0)))    # resident cols
    else:
        in_specs.append(pl.BlockSpec((tile, D), lambda i, j: (j, 0)))  # tiled cols
    in_specs.append(pl.BlockSpec((Np, 1), lambda i, j: (0, 0)))        # resident row labels
    in_specs.append(pl.BlockSpec((1, tile), lambda i, j: (0, j)))      # column labels tile

    out_shape = []
    out_specs = []
    if include_dist:
        out_shape.append(jax.ShapeDtypeStruct((Np, Np), dist_dtype))
        out_specs.append(pl.BlockSpec((tile, tile), lambda i, j: (i, j)))
    out_shape.append(jax.ShapeDtypeStruct((Np, Np), jnp.int8))
    out_specs.append(pl.BlockSpec((tile, tile), lambda i, j: (i, j)))

    # VMEM budget: double-buffered inputs/outputs + resident blocks + headroom.
    vmem_bytes = 2 * tile * D * itemsize                                   # row emb
    vmem_bytes += (2 * Np * D * itemsize) if ec_resident else (2 * tile * D * itemsize)
    vmem_bytes += 2 * Np * 4 + 2 * tile * 4                                # labels
    vmem_bytes += 2 * tile * tile                                          # packed mask
    if include_dist:
        vmem_bytes += 2 * tile * tile * jnp.dtype(dist_dtype).itemsize
    vmem_limit = int(min(max(2 * vmem_bytes + (2 << 20), 8 << 20), 32 << 20))

    kernel = functools.partial(_pair_margin_miner_kernel,
                               tile=tile, include_dist=include_dist,
                               ec_resident=ec_resident, dist_dtype=dist_dtype)

    outs = pl.pallas_call(
        kernel,
        out_shape=tuple(out_shape),
        grid_spec=pltpu.PrefetchScalarGridSpec(
            num_scalar_prefetch=0,
            grid=(Np // tile, Np // tile),
            in_specs=in_specs,
            out_specs=tuple(out_specs)),
        compiler_params=pltpu.CompilerParams(
            dimension_semantics=("parallel", "parallel"),
            vmem_limit_bytes=vmem_limit),
    )(emb_c, emb_c, labels_row, labels_col)

    if not isinstance(outs, (tuple, list)):
        outs = (outs,)
    outs = tuple(o[:N, :N] for o in outs)   # drop padding
    if include_dist:
        dist, bits = outs
        return dist, bits
    (bits,) = outs
    return bits


def distributed_miner_wrapper_forward(per_rank_embeddings, per_rank_labels,
                                      ref_emb=None, ref_labels=None,
                                      include_dist=False, **kwargs):
    """DistributedMinerWrapper.forward.

    all_gather_embeddings_labels == concatenation along the batch axis (glue).
    Returns the packed int8 mined-pair mask (and optionally the bf16 distance
    matrix); use unpack_pair_masks to split into pos/neg masks.
    """
    embeddings = jnp.concatenate(per_rank_embeddings, axis=0)
    labels = jnp.concatenate(per_rank_labels, axis=0)
    if ref_emb is not None:
        # TODO(synk): ref_emb path would gather refs the same way and skip the
        # diagonal exclusion; not exercised in this synthetic demo.
        raise NotImplementedError
    return pair_margin_miner(embeddings, labels, include_dist=include_dist, **kwargs)


if __name__ == "__main__":
    key = jax.random.PRNGKey(0)
    k0, k1, k2, k3 = jax.random.split(key, 4)

    B, D = 8, 32          # local batch per "rank", embedding dim
    NUM_CLASSES = 4

    # Two simulated ranks (world_size = 2) -> gathered batch N = 16.
    emb_rank0 = jax.random.normal(k0, (B, D), dtype=jnp.float32)
    emb_rank1 = jax.random.normal(k1, (B, D), dtype=jnp.float32)
    lbl_rank0 = jax.random.randint(k2, (B,), 0, NUM_CLASSES, dtype=jnp.int32)
    lbl_rank1 = jax.random.randint(k3, (B,), 0, NUM_CLASSES, dtype=jnp.int32)

    # Default fast path: packed int8 mask only (no dense distance writeback).
    bits = distributed_miner_wrapper_forward(
        [emb_rank0, emb_rank1], [lbl_rank0, lbl_rank1])
    jax.block_until_ready(bits)
    pos_mask, neg_mask = unpack_pair_masks(bits)

    # Optional path: also emit the bf16 distance matrix.
    dist_bf, bits_d = distributed_miner_wrapper_forward(
        [emb_rank0, emb_rank1], [lbl_rank0, lbl_rank1], include_dist=True)
    jax.block_until_ready((dist_bf, bits_d))

    # f32-compute parity path (MXU in f32 mode) for tighter mask comparison.
    bits_f32 = distributed_miner_wrapper_forward(
        [emb_rank0, emb_rank1], [lbl_rank0, lbl_rank1],
        compute_dtype=jnp.float32)
    jax.block_until_ready(bits_f32)
    pos_f32, neg_f32 = unpack_pair_masks(bits_f32)

    # Plain-JAX f32 reference.
    emb = jnp.concatenate([emb_rank0, emb_rank1], axis=0)
    lbl = jnp.concatenate([lbl_rank0, lbl_rank1], axis=0)
    N = emb.shape[0]
    emb_n = emb / jnp.maximum(jnp.linalg.norm(emb, axis=-1, keepdims=True), 1e-12)
    ref_d = jnp.sqrt(jnp.maximum(2.0 - 2.0 * (emb_n @ emb_n.T), 0.0))
    eye = jnp.eye(N, dtype=bool)
    ref_d = jnp.where(eye, 0.0, ref_d)
    same = lbl[:, None] == lbl[None, :]
    ref_pos = (same & ~eye & (ref_d > POS_MARGIN)).astype(jnp.int8)
    ref_neg = (~same & (ref_d < NEG_MARGIN)).astype(jnp.int8)

    # bf16 MXU inputs + bf16 stored distances vs f32 reference.
    assert jnp.allclose(dist_bf.astype(jnp.float32), ref_d, atol=4e-2), "distance mismatch"
    assert jnp.array_equal(bits, bits_d), "include_dist mask mismatch"

    # Mask comparison, ignoring entries whose reference distance sits within the
    # compute-error band of a margin (empty for this data; keeps the check robust).
    band = 2e-2
    safe = (jnp.abs(ref_d - POS_MARGIN) > band) & (jnp.abs(ref_d - NEG_MARGIN) > band)

    def _masked(m):
        return jnp.where(safe, m.astype(jnp.int32), 0)

    assert jnp.array_equal(_masked(pos_mask), _masked(ref_pos)), "pos mask mismatch"
    assert jnp.array_equal(_masked(neg_mask), _masked(ref_neg)), "neg mask mismatch"
    assert jnp.array_equal(_masked(pos_f32), _masked(ref_pos)), "f32 pos mask mismatch"
    assert jnp.array_equal(_masked(neg_f32), _masked(ref_neg)), "f32 neg mask mismatch"

    print("KERNEL_OK")
</pallas_src>

<mosaic_0001>
module attributes {stable_mosaic.version = 11 : i64} {
  func.func @_pair_margin_miner_kernel(%arg0: i32, %arg1: i32, %arg2: memref<128x32xbf16, #tpu.memory_space<vmem>>, %arg3: memref<128x32xbf16, #tpu.memory_space<vmem>>, %arg4: memref<128x1xi32, #tpu.memory_space<vmem>>, %arg5: memref<1x128xi32, #tpu.memory_space<vmem>>, %arg6: memref<128x128xi8, #tpu.memory_space<vmem>>) attributes {dimension_semantics = [#tpu.dimension_semantics<parallel>, #tpu.dimension_semantics<parallel>], iteration_bounds = array<i64: 1, 1>, scalar_prefetch = 0 : i64, scratch_operands = 0 : i64, tpu.core_type = #tpu.core_type<tc>, window_params = [{transform_indices = @transform_0, window_bounds = array<i64: 128, 32>}, {pipeline_mode = #tpu.pipeline_mode<synchronous>, transform_indices = @transform_1, window_bounds = array<i64: 128, 32>}, {pipeline_mode = #tpu.pipeline_mode<synchronous>, transform_indices = @transform_2, window_bounds = array<i64: 128, 1>}, {transform_indices = @transform_3, window_bounds = array<i64: 1, 128>}, {transform_indices = @transform_4, window_bounds = array<i64: 128, 128>}]} {
    %c0 = arith.constant 0 : index
    %c0_0 = arith.constant 0 : index
    %0 = vector.load %arg2[%c0, %c0_0] : memref<128x32xbf16, #tpu.memory_space<vmem>>, vector<128x32xbf16>
    %c128_i32 = arith.constant 128 : i32
    %1 = arith.muli %arg1, %c128_i32 : i32
    %2 = tpu.assume_multiple %1, 128 : i32
    %3 = arith.index_cast %2 : i32 to index
    %c0_1 = arith.constant 0 : index
    %4 = vector.load %arg3[%3, %c0_1] : memref<128x32xbf16, #tpu.memory_space<vmem>>, vector<128x32xbf16>
    %c128_i32_2 = arith.constant 128 : i32
    %5 = arith.muli %arg0, %c128_i32_2 : i32
    %6 = tpu.assume_multiple %5, 128 : i32
    %7 = arith.index_cast %6 : i32 to index
    %c0_3 = arith.constant 0 : index
    %8 = vector.load %arg4[%7, %c0_3] : memref<128x1xi32, #tpu.memory_space<vmem>>, vector<128x1xi32>
    %c0_4 = arith.constant 0 : index
    %c0_5 = arith.constant 0 : index
    %9 = vector.load %arg5[%c0_4, %c0_5] : memref<1x128xi32, #tpu.memory_space<vmem>>, vector<1x128xi32>
    %cst = arith.constant dense<0.000000e+00> : vector<128x128xf32>
    %10 = tpu.matmul %0, %4, %cst {dimension_numbers = #tpu.dot_dimension_numbers<[1], [1], [0], [0], [0, 0, 1, 0], [], []>} : vector<128x32xbf16>, vector<128x32xbf16>, vector<128x128xf32> -> vector<128x128xf32>
    %cst_6 = arith.constant 2.000000e+00 : f32
    %11 = vector.broadcast %cst_6 : f32 to vector<128x128xf32>
    %12 = arith.mulf %11, %10 : vector<128x128xf32>
    %cst_7 = arith.constant 2.000000e+00 : f32
    %13 = vector.broadcast %cst_7 : f32 to vector<128x128xf32>
    %14 = arith.subf %13, %12 : vector<128x128xf32>
    %cst_8 = arith.constant 0.000000e+00 : f32
    %15 = vector.broadcast %cst_8 : f32 to vector<128x128xf32>
    %16 = arith.maximumf %14, %15 : vector<128x128xf32>
    %17 = vector.broadcast %8 : vector<128x1xi32> to vector<128x128xi32>
    %18 = vector.broadcast %9 : vector<1x128xi32> to vector<128x128xi32>
    %19 = arith.cmpi eq, %17, %18 : vector<128x128xi32>
    %cst_9 = arith.constant 4.000000e-02 : f32
    %20 = vector.broadcast %cst_9 : f32 to vector<128x128xf32>
    %21 = arith.cmpf ogt, %16, %20 : vector<128x128xf32>
    %22 = arith.andi %19, %21 : vector<128x128xi1>
    %cst_10 = arith.constant dense<true> : vector<128x128xi1>
    %23 = arith.xori %19, %cst_10 : vector<128x128xi1>
    %cst_11 = arith.constant 6.400000e-01 : f32
    %24 = vector.broadcast %cst_11 : f32 to vector<128x128xf32>
    %25 = arith.cmpf olt, %16, %24 : vector<128x128xf32>
    %26 = arith.andi %23, %25 : vector<128x128xi1>
    %27 = arith.extui %22 : vector<128x128xi1> to vector<128x128xi32>
    %28 = arith.extui %26 : vector<128x128xi1> to vector<128x128xi32>
    %c1_i32 = arith.constant 1 : i32
    %29 = vector.broadcast %c1_i32 : i32 to vector<128x128xi32>
    %30 = arith.shli %28, %29 : vector<128x128xi32>
    %31 = arith.ori %27, %30 : vector<128x128xi32>
    %32 = arith.trunci %31 : vector<128x128xi32> to vector<128x128xi8>
    %c0_12 = arith.constant 0 : index
    %c0_13 = arith.constant 0 : index
    %33 = vector.load %arg6[%c0_12, %c0_13] : memref<128x128xi8, #tpu.memory_space<vmem>>, vector<128x128xi8>
    tpu.vector_store %arg6[%c0_12, %c0_13], %32 {strides = array<i32>} : memref<128x128xi8, #tpu.memory_space<vmem>>, vector<128x128xi8>,
    %34 = arith.cmpi eq, %arg0, %arg1 : i32
    %35 = arith.extui %34 : i1 to i32
    %c0_i32 = arith.constant 0 : i32
    %36 = arith.cmpi ne, %35, %c0_i32 : i32
    scf.if %36 {
      %37 = tpu.iota {dimensions = array<i32: 0>} : vector<128x128xi32>
      %38 = tpu.iota {dimensions = array<i32: 1>} : vector<128x128xi32>
      %39 = arith.cmpi eq, %37, %38 : vector<128x128xi32>
      %cst_14 = arith.constant dense<true> : vector<128x128xi1>
      %40 = arith.xori %39, %cst_14 : vector<128x128xi1>
      %41 = arith.andi %22, %40 : vector<128x128xi1>
      %42 = arith.extui %41 : vector<128x128xi1> to vector<128x128xi32>
      %43 = arith.extui %26 : vector<128x128xi1> to vector<128x128xi32>
      %c1_i32_15 = arith.constant 1 : i32
      %44 = vector.broadcast %c1_i32_15 : i32 to vector<128x128xi32>
      %45 = arith.shli %43, %44 : vector<128x128xi32>
      %46 = arith.ori %42, %45 : vector<128x128xi32>
      %47 = arith.trunci %46 : vector<128x128xi32> to vector<128x128xi8>
      %c0_16 = arith.constant 0 : index
      %c0_17 = arith.constant 0 : index
      %48 = vector.load %arg6[%c0_16, %c0_17] : memref<128x128xi8, #tpu.memory_space<vmem>>, vector<128x128xi8>
      tpu.vector_store %arg6[%c0_16, %c0_17], %47 {strides = array<i32>} : memref<128x128xi8, #tpu.memory_space<vmem>>, vector<128x128xi8>,
    } else {
    }
    return
  }
  func.func @transform_0(%arg0: i32, %arg1: i32) -> (i32, i32) {
    %c0_i32 = arith.constant 0 : i32
    %c0_i32_0 = arith.constant 0 : i32
    return %arg0, %c0_i32 : i32, i32
  }
  func.func @transform_1(%arg0: i32, %arg1: i32) -> (i32, i32) {
    %c0_i32 = arith.constant 0 : i32
    %c0_i32_0 = arith.constant 0 : i32
    %c0_i32_1 = arith.constant 0 : i32
    return %c0_i32, %c0_i32_0 : i32, i32
  }
  func.func @transform_2(%arg0: i32, %arg1: i32) -> (i32, i32) {
    %c0_i32 = arith.constant 0 : i32
    %c0_i32_0 = arith.constant 0 : i32
    %c0_i32_1 = arith.constant 0 : i32
    return %c0_i32, %c0_i32_0 : i32, i32
  }
  func.func @transform_3(%arg0: i32, %arg1: i32) -> (i32, i32) {
    %c0_i32 = arith.constant 0 : i32
    %c0_i32_0 = arith.constant 0 : i32
    return %c0_i32, %arg1 : i32, i32
  }
  func.func @transform_4(%arg0: i32, %arg1: i32) -> (i32, i32) {
    %c0_i32 = arith.constant 0 : i32
    return %arg0, %arg1 : i32, i32
  }
}

</mosaic_0001>

<llo_original>
// kernel: tpu_custom_call.1
$region0: #{tpu_custom_call.1}
  #allocation0 [shape = 'u32[]', space=smem, size = 0x4, offset = 0x4, fixed_abs, tag = 'smem constant byte address 0x4 - core index']
  #allocation1 [shape = 'u32[144,128]{1,0:T(1,128)}', space=vmem, size = 0x12000, scoped, tag = 'internal scratch']
  %s0 = inlined_call_operand.vmem [shape: bf16[128,32], index: 0, kind: input, shape index: {}]
  %s1 = inlined_call_operand.vmem [shape: bf16[128,32], index: 1, kind: input, shape index: {}]
  %s2 = inlined_call_operand.vmem [shape: s32[128,1], index: 2, kind: input, shape index: {}]
  %s3 = inlined_call_operand.vmem [shape: s32[1,128], index: 3, kind: input, shape index: {}]
  %s4 = inlined_call_operand.hbm [shape: s8[128,128], index: 4, kind: output, shape index: {}]
  %s5 = sld [smem:[#allocation0]]
  $region30: #{tpu_custom_call.1} parent=0
    _
  %s7 = ssub.s32 1, %s5
  %s8 = scalar_select 0, %s7, %s5
  $region1: #{tpu_custom_call.1} parent=0
    #allocation2 [shape = 'u8[16384]{0}', space=vmem, size = 0x4000, scoped, tag = 'output window, operand 0, single buffered']
    #allocation3 [shape = 's32[1]{0}', space=sflag, size = 0x4, scoped, tag = 'scoped memory for tpu_custom_call.1']
    %9 = vsyncpa [#allocation3], 0
    // Predicated region
    $region2: #{tpu_custom_call.1} parent=1 // pred_check
      _
    $region3: #{tpu_custom_call.1} parent=1 // pred_check_branch
      %11 = sbr.rel (0) target = $region5
    $region4: #{tpu_custom_call.1} parent=1 // pred_region
      _
    $region5: #{tpu_custom_call.1} parent=1 // pred_fallthru
      _
    // Predicated region
    $region6: #{tpu_custom_call.1} parent=1 // pred_check
      _
    $region7: #{tpu_custom_call.1} parent=1 // pred_check_branch
      %13 = sbr.rel (0) target = $region9
    $region8: #{tpu_custom_call.1} parent=1 // pred_region
      _
    $region9: #{tpu_custom_call.1} parent=1 // pred_fallthru
      _
    // Predicated region
    $region10: #{tpu_custom_call.1} parent=1 // pred_check
      _
    $region11: #{tpu_custom_call.1} parent=1 // pred_check_branch
      %15 = sbr.rel (0) target = $region13
    $region12: #{tpu_custom_call.1} parent=1 // pred_region
      _
    $region13: #{tpu_custom_call.1} parent=1 // pred_fallthru
      _
    // Predicated region
    $region14: #{tpu_custom_call.1} parent=1 // pred_check
      _
    $region15: #{tpu_custom_call.1} parent=1 // pred_check_branch
      %17 = sbr.rel (0) target = $region17
    $region16: #{tpu_custom_call.1} parent=1 // pred_region
      _
    $region17: #{tpu_custom_call.1} parent=1 // pred_fallthru
      _
    %v19 = vld [vmem:[%s0] sm:$0xf]
    %v20 = vld [vmem:[%s0 + $0x4] sm:$0xf]
    %v21 = vld [vmem:[%s0 + $0x8] sm:$0xf]
    %v22 = vld [vmem:[%s0 + $0xc] sm:$0xf]
    %v23 = vld [vmem:[%s0 + $0x10] sm:$0xf]
    %v24 = vld [vmem:[%s0 + $0x14] sm:$0xf]
    %v25 = vld [vmem:[%s0 + $0x18] sm:$0xf]
    %v26 = vld [vmem:[%s0 + $0x1c] sm:$0xf]
    %v27 = vld [vmem:[%s0 + $0x20] sm:$0xf]
    %v28 = vld [vmem:[%s0 + $0x24] sm:$0xf]
    %v29 = vld [vmem:[%s0 + $0x28] sm:$0xf]
    %v30 = vld [vmem:[%s0 + $0x2c] sm:$0xf]
    %v31 = vld [vmem:[%s0 + $0x30] sm:$0xf]
    %v32 = vld [vmem:[%s0 + $0x34] sm:$0xf]
    %v33 = vld [vmem:[%s0 + $0x38] sm:$0xf]
    %v34 = vld [vmem:[%s0 + $0x3c] sm:$0xf]
    %s35 = smul.u32 0, 128
    %s36 = sshra.s32 %s35, 3
    %s37 = sand.u32 %s35, 7
    %s38 = smul.addr %s36, 4
    %s39 = scalar_lea.vmem %s1, %s38
    %v40 = vld [vmem:[%s39] sm:$0xf]
    %v41 = vld [vmem:[%s39 + $0x4] sm:$0xf]
    %v42 = vld [vmem:[%s39 + $0x8] sm:$0xf]
    %v43 = vld [vmem:[%s39 + $0xc] sm:$0xf]
    %v44 = vld [vmem:[%s39 + $0x10] sm:$0xf]
    %v45 = vld [vmem:[%s39 + $0x14] sm:$0xf]
    %v46 = vld [vmem:[%s39 + $0x18] sm:$0xf]
    %v47 = vld [vmem:[%s39 + $0x1c] sm:$0xf]
    %v48 = vld [vmem:[%s39 + $0x20] sm:$0xf]
    %v49 = vld [vmem:[%s39 + $0x24] sm:$0xf]
    %v50 = vld [vmem:[%s39 + $0x28] sm:$0xf]
    %v51 = vld [vmem:[%s39 + $0x2c] sm:$0xf]
    %v52 = vld [vmem:[%s39 + $0x30] sm:$0xf]
    %v53 = vld [vmem:[%s39 + $0x34] sm:$0xf]
    %v54 = vld [vmem:[%s39 + $0x38] sm:$0xf]
    %v55 = vld [vmem:[%s39 + $0x3c] sm:$0xf]
    %s56 = smul.u32 0, 128
    %s57 = scalar_lea.vmem %s2, %s56
    %v58 = vld [vmem:[%s57] sm:$0xff]
    %v59 = vld [vmem:[%s57 + $0x8] sm:$0xff]
    %v60 = vld [vmem:[%s57 + $0x10] sm:$0xff]
    %v61 = vld [vmem:[%s57 + $0x18] sm:$0xff]
    %v62 = vld [vmem:[%s57 + $0x20] sm:$0xff]
    %v63 = vld [vmem:[%s57 + $0x28] sm:$0xff]
    %v64 = vld [vmem:[%s57 + $0x30] sm:$0xff]
    %v65 = vld [vmem:[%s57 + $0x38] sm:$0xff]
    %v66 = vld [vmem:[%s57 + $0x40] sm:$0xff]
    %v67 = vld [vmem:[%s57 + $0x48] sm:$0xff]
    %v68 = vld [vmem:[%s57 + $0x50] sm:$0xff]
    %v69 = vld [vmem:[%s57 + $0x58] sm:$0xff]
    %v70 = vld [vmem:[%s57 + $0x60] sm:$0xff]
    %v71 = vld [vmem:[%s57 + $0x68] sm:$0xff]
    %v72 = vld [vmem:[%s57 + $0x70] sm:$0xff]
    %v73 = vld [vmem:[%s57 + $0x78] sm:$0xff]
    %v74 = vld [vmem:[%s3] sm:$0x1]
    %v91 = vunpack.c.l.b16 %v19
    %v92 = vunpack.c.l.b16 %v20
    %v93 = vunpack.c.l.b16 %v21
    %v94 = vunpack.c.l.b16 %v22
    %v95 = vunpack.c.l.b16 %v23
    %v96 = vunpack.c.l.b16 %v24
    %v97 = vunpack.c.l.b16 %v25
    %v98 = vunpack.c.l.b16 %v26
    %v99 = vunpack.c.l.b16 %v27
    %v100 = vunpack.c.l.b16 %v28
    %v101 = vunpack.c.l.b16 %v29
    %v102 = vunpack.c.l.b16 %v30
    %v103 = vunpack.c.l.b16 %v31
    %v104 = vunpack.c.l.b16 %v32
    %v105 = vunpack.c.l.b16 %v33
    %v106 = vunpack.c.l.b16 %v34
    %v107 = vpack.c.b16 %v92, %v91
    %v108 = vpack.c.b16 %v94, %v93
    %v109 = vpack.c.b16 %v96, %v95
    %v110 = vpack.c.b16 %v98, %v97
    %v111 = vpack.c.b16 %v100, %v99
    %v112 = vpack.c.b16 %v102, %v101
    %v113 = vpack.c.b16 %v104, %v103
    %v114 = vpack.c.b16 %v106, %v105
    %v131 = vunpack.c.l.b16 %v40
    %v132 = vunpack.c.l.b16 %v41
    %v133 = vunpack.c.l.b16 %v42
    %v134 = vunpack.c.l.b16 %v43
    %v135 = vunpack.c.l.b16 %v44
    %v136 = vunpack.c.l.b16 %v45
    %v137 = vunpack.c.l.b16 %v46
    %v138 = vunpack.c.l.b16 %v47
    %v139 = vunpack.c.l.b16 %v48
    %v140 = vunpack.c.l.b16 %v49
    %v141 = vunpack.c.l.b16 %v50
    %v142 = vunpack.c.l.b16 %v51
    %v143 = vunpack.c.l.b16 %v52
    %v144 = vunpack.c.l.b16 %v53
    %v145 = vunpack.c.l.b16 %v54
    %v146 = vunpack.c.l.b16 %v55
    %v147 = vpack.c.b16 %v132, %v131
    %v148 = vpack.c.b16 %v134, %v133
    %v149 = vpack.c.b16 %v136, %v135
    %v150 = vpack.c.b16 %v138, %v137
    %v151 = vpack.c.b16 %v140, %v139
    %v152 = vpack.c.b16 %v142, %v141
    %v153 = vpack.c.b16 %v144, %v143
    %v154 = vpack.c.b16 %v146, %v145
    %vm155 = vcmask 261120
    %v157 = vsel %vm155, %v107, 0
    %v160 = vsel %vm155, %v108, 0
    %v163 = vsel %vm155, %v109, 0
    %v166 = vsel %vm155, %v110, 0
    %v169 = vsel %vm155, %v111, 0
    %v172 = vsel %vm155, %v112, 0
    %v175 = vsel %vm155, %v113, 0
    %v178 = vsel %vm155, %v114, 0
    %v181 = vsel %vm155, %v147, 0
    %v184 = vsel %vm155, %v148, 0
    %v187 = vsel %vm155, %v149, 0
    %v190 = vsel %vm155, %v150, 0
    %v193 = vsel %vm155, %v151, 0
    %v196 = vsel %vm155, %v152, 0
    %v199 = vsel %vm155, %v153, 0
    %v202 = vsel %vm155, %v154, 0
    %204 = vmatprep.subr.bf16.mxu0 0
    %205 = vmatpush1.bf16.xpose.msra.mxu0 %v181
    %206 = vmatprep.subr.bf16.mxu0 0
    %207 = vmatpush1.bf16.xpose.msra.mxu0 %v184
    %208 = vmatprep.subr.bf16.mxu0 0
    %209 = vmatpush1.bf16.xpose.msra.mxu0 %v187
    %210 = vmatprep.subr.bf16.mxu0 0
    %211 = vmatpush1.bf16.xpose.msra.mxu0 %v190
    %212 = vmatprep.subr.bf16.mxu0 0
    %213 = vmatpush1.bf16.xpose.msra.mxu0 %v193
    %214 = vmatprep.subr.bf16.mxu0 0
    %215 = vmatpush1.bf16.xpose.msra.mxu0 %v196
    %216 = vmatprep.subr.bf16.mxu0 0
    %217 = vmatpush1.bf16.xpose.msra.mxu0 %v199
    %218 = vmatprep.subr.bf16.mxu0 0
    %219 = vmatpush1.bf16.xpose.msra.mxu0 %v202
    %220 = vmatprep.subr.bf16.mxu0 0
    %221 = vmatpush1.bf16.xpose.msra.mxu0 0
    %222 = vmatprep.subr.bf16.mxu0 0
    %223 = vmatpush1.bf16.xpose.msra.mxu0 0
    %224 = vmatprep.subr.bf16.mxu0 0
    %225 = vmatpush1.bf16.xpose.msra.mxu0 0
    %226 = vmatprep.subr.bf16.mxu0 0
    %227 = vmatpush1.bf16.xpose.msra.mxu0 0
    %228 = vmatprep.subr.bf16.mxu0 0
    %229 = vmatpush1.bf16.xpose.msra.mxu0 0
    %230 = vmatprep.subr.bf16.mxu0 0
    %231 = vmatpush1.bf16.xpose.msra.mxu0 0
    %232 = vmatprep.subr.bf16.mxu0 0
    %233 = vmatpush1.bf16.xpose.msra.mxu0 0
    %234 = vmatprep.subr.bf16.mxu0 0
    %235 = vmatpush1.bf16.xpose.msra.mxu0 0
    %236 = vmatprep.mubr.bf16.mxu0 0
    %237 = vmatmul.mubr.bf16.gmra.mrb[0].mxu0 %v157
    %v238 = vpop.f32.mrb[0].mxu0
    %v239 = vadd.f32 0.0, %v238
    %v240 = vpop.f32.mrb[0].mxu0
    %v241 = vpop.f32.mrb[0].mxu0
    %v242 = vadd.f32 0.0, %v241
    %v243 = vpop.f32.mrb[0].mxu0
    %244 = vmatprep.mubr.bf16.mxu0 0
    %245 = vmatmul.mubr.bf16.gmra.mrb[0].mxu0 %v160
    %v246 = vpop.f32.mrb[0].mxu0
    %v247 = vadd.f32 0.0, %v246
    %v248 = vpop.f32.mrb[0].mxu0
    %v249 = vpop.f32.mrb[0].mxu0
    %v250 = vadd.f32 0.0, %v249
    %v251 = vpop.f32.mrb[0].mxu0
    %252 = vmatprep.mubr.bf16.mxu0 0
    %253 = vmatmul.mubr.bf16.gmra.mrb[0].mxu0 %v163
    %v254 = vpop.f32.mrb[0].mxu0
    %v255 = vadd.f32 0.0, %v254
    %v256 = vpop.f32.mrb[0].mxu0
    %v257 = vpop.f32.mrb[0].mxu0
    %v258 = vadd.f32 0.0, %v257
    %v259 = vpop.f32.mrb[0].mxu0
    %260 = vmatprep.mubr.bf16.mxu0 0
    %261 = vmatmul.mubr.bf16.gmra.mrb[0].mxu0 %v166
    %v262 = vpop.f32.mrb[0].mxu0
    %v263 = vadd.f32 0.0, %v262
    %v264 = vpop.f32.mrb[0].mxu0
    %v265 = vpop.f32.mrb[0].mxu0
    %v266 = vadd.f32 0.0, %v265
    %v267 = vpop.f32.mrb[0].mxu0
    %268 = vmatprep.mubr.bf16.mxu0 0
    %269 = vmatmul.mubr.bf16.gmra.mrb[0].mxu0 %v169
    %v270 = vpop.f32.mrb[0].mxu0
    %v271 = vadd.f32 0.0, %v270
    %v272 = vpop.f32.mrb[0].mxu0
    %v273 = vpop.f32.mrb[0].mxu0
    %v274 = vadd.f32 0.0, %v273
    %v275 = vpop.f32.mrb[0].mxu0
    %276 = vmatprep.mubr.bf16.mxu0 0
    %277 = vmatmul.mubr.bf16.gmra.mrb[0].mxu0 %v172
    %v278 = vpop.f32.mrb[0].mxu0
    %v279 = vadd.f32 0.0, %v278
    %v280 = vpop.f32.mrb[0].mxu0
    %v281 = vpop.f32.mrb[0].mxu0
    %v282 = vadd.f32 0.0, %v281
    %v283 = vpop.f32.mrb[0].mxu0
    %284 = vmatprep.mubr.bf16.mxu0 0
    %285 = vmatmul.mubr.bf16.gmra.mrb[0].mxu0 %v175
    %v286 = vpop.f32.mrb[0].mxu0
    %v287 = vadd.f32 0.0, %v286
    %v288 = vpop.f32.mrb[0].mxu0
    %v289 = vpop.f32.mrb[0].mxu0
    %v290 = vadd.f32 0.0, %v289
    %v291 = vpop.f32.mrb[0].mxu0
    %292 = vmatprep.mubr.bf16.mxu0 0
    %293 = vmatmul.mubr.bf16.gmra.mrb[0].mxu0 %v178
    %v294 = vpop.f32.mrb[0].mxu0
    %v295 = vadd.f32 0.0, %v294
    %v296 = vpop.f32.mrb[0].mxu0
    %v297 = vpop.f32.mrb[0].mxu0
    %v298 = vadd.f32 0.0, %v297
    %v299 = vpop.f32.mrb[0].mxu0
    %300 = vdwg.mxu0
    %v301 = vmul.f32 %v239, 2.0
    %v302 = vmul.f32 %v242, 2.0
    %v303 = vmul.f32 %v247, 2.0
    %v304 = vmul.f32 %v250, 2.0
    %v305 = vmul.f32 %v255, 2.0
    %v306 = vmul.f32 %v258, 2.0
    %v307 = vmul.f32 %v263, 2.0
    %v308 = vmul.f32 %v266, 2.0
    %v309 = vmul.f32 %v271, 2.0
    %v310 = vmul.f32 %v274, 2.0
    %v311 = vmul.f32 %v279, 2.0
    %v312 = vmul.f32 %v282, 2.0
    %v313 = vmul.f32 %v287, 2.0
    %v314 = vmul.f32 %v290, 2.0
    %v315 = vmul.f32 %v295, 2.0
    %v316 = vmul.f32 %v298, 2.0
    %v317 = vsub.f32 2.0, %v301
    %v318 = vsub.f32 2.0, %v302
    %v319 = vsub.f32 2.0, %v303
    %v320 = vsub.f32 2.0, %v304
    %v321 = vsub.f32 2.0, %v305
    %v322 = vsub.f32 2.0, %v306
    %v323 = vsub.f32 2.0, %v307
    %v324 = vsub.f32 2.0, %v308
    %v325 = vsub.f32 2.0, %v309
    %v326 = vsub.f32 2.0, %v310
    %v327 = vsub.f32 2.0, %v311
    %v328 = vsub.f32 2.0, %v312
    %v329 = vsub.f32 2.0, %v313
    %v330 = vsub.f32 2.0, %v314
    %v331 = vsub.f32 2.0, %v315
    %v332 = vsub.f32 2.0, %v316
    %v333 = vmax.f32 %v317, 0.0
    %v334 = vmax.f32 %v318, 0.0
    %v335 = vmax.f32 %v319, 0.0
    %v336 = vmax.f32 %v320, 0.0
    %v337 = vmax.f32 %v321, 0.0
    %v338 = vmax.f32 %v322, 0.0
    %v339 = vmax.f32 %v323, 0.0
    %v340 = vmax.f32 %v324, 0.0
    %v341 = vmax.f32 %v325, 0.0
    %v342 = vmax.f32 %v326, 0.0
    %v343 = vmax.f32 %v327, 0.0
    %v344 = vmax.f32 %v328, 0.0
    %v345 = vmax.f32 %v329, 0.0
    %v346 = vmax.f32 %v330, 0.0
    %v347 = vmax.f32 %v331, 0.0
    %v348 = vmax.f32 %v332, 0.0
    %349 = vset.pattern.permute.xlu0 0
    %350 = vperm.xlu0 %349, %v58
    %v351 = vpop.permute.xlu0 %350
    %352 = vset.pattern.permute.xlu0 0
    %353 = vperm.xlu0 %352, %v59
    %v354 = vpop.permute.xlu0 %353
    %355 = vset.pattern.permute.xlu0 0
    %356 = vperm.xlu0 %355, %v60
    %v357 = vpop.permute.xlu0 %356
    %358 = vset.pattern.permute.xlu0 0
    %359 = vperm.xlu0 %358, %v61
    %v360 = vpop.permute.xlu0 %359
    %361 = vset.pattern.permute.xlu0 0
    %362 = vperm.xlu0 %361, %v62
    %v363 = vpop.permute.xlu0 %362
    %364 = vset.pattern.permute.xlu0 0
    %365 = vperm.xlu0 %364, %v63
    %v366 = vpop.permute.xlu0 %365
    %367 = vset.pattern.permute.xlu0 0
    %368 = vperm.xlu0 %367, %v64
    %v369 = vpop.permute.xlu0 %368
    %370 = vset.pattern.permute.xlu0 0
    %371 = vperm.xlu0 %370, %v65
    %v372 = vpop.permute.xlu0 %371
    %373 = vset.pattern.permute.xlu0 0
    %374 = vperm.xlu0 %373, %v66
    %v375 = vpop.permute.xlu0 %374
    %376 = vset.pattern.permute.xlu0 0
    %377 = vperm.xlu0 %376, %v67
    %v378 = vpop.permute.xlu0 %377
    %379 = vset.pattern.permute.xlu0 0
    %380 = vperm.xlu0 %379, %v68
    %v381 = vpop.permute.xlu0 %380
    %382 = vset.pattern.permute.xlu0 0
    %383 = vperm.xlu0 %382, %v69
    %v384 = vpop.permute.xlu0 %383
    %385 = vset.pattern.permute.xlu0 0
    %386 = vperm.xlu0 %385, %v70
    %v387 = vpop.permute.xlu0 %386
    %388 = vset.pattern.permute.xlu0 0
    %389 = vperm.xlu0 %388, %v71
    %v390 = vpop.permute.xlu0 %389
    %391 = vset.pattern.permute.xlu0 0
    %392 = vperm.xlu0 %391, %v72
    %v393 = vpop.permute.xlu0 %392
    %394 = vset.pattern.permute.xlu0 0
    %395 = vperm.xlu0 %394, %v73
    %v396 = vpop.permute.xlu0 %395
    %v397 = vlaneseq
    %v398 = vshrl.u32 %v397, 7
    %v399 = vsub.s32 0, %v398
    %v400 = vrot.slane %v74, %v399
    %vm401 = vcmp.eq.s32.totalorder %v351, %v400
    %vm402 = vcmp.eq.s32.totalorder %v354, %v400
    %vm403 = vcmp.eq.s32.totalorder %v357, %v400
    %vm404 = vcmp.eq.s32.totalorder %v360, %v400
    %vm405 = vcmp.eq.s32.totalorder %v363, %v400
    %vm406 = vcmp.eq.s32.totalorder %v366, %v400
    %vm407 = vcmp.eq.s32.totalorder %v369, %v400
    %vm408 = vcmp.eq.s32.totalorder %v372, %v400
    %vm409 = vcmp.eq.s32.totalorder %v375, %v400
    %vm410 = vcmp.eq.s32.totalorder %v378, %v400
    %vm411 = vcmp.eq.s32.totalorder %v381, %v400
    %vm412 = vcmp.eq.s32.totalorder %v384, %v400
    %vm413 = vcmp.eq.s32.totalorder %v387, %v400
    %vm414 = vcmp.eq.s32.totalorder %v390, %v400
    %vm415 = vcmp.eq.s32.totalorder %v393, %v400
    %vm416 = vcmp.eq.s32.totalorder %v396, %v400
    %vm417 = vcmp.gt.f32.partialorder %v333, 0.04
    %vm418 = vcmp.gt.f32.partialorder %v334, 0.04
    %vm419 = vcmp.gt.f32.partialorder %v335, 0.04
    %vm420 = vcmp.gt.f32.partialorder %v336, 0.04
    %vm421 = vcmp.gt.f32.partialorder %v337, 0.04
    %vm422 = vcmp.gt.f32.partialorder %v338, 0.04
    %vm423 = vcmp.gt.f32.partialorder %v339, 0.04
    %vm424 = vcmp.gt.f32.partialorder %v340, 0.04
    %vm425 = vcmp.gt.f32.partialorder %v341, 0.04
    %vm426 = vcmp.gt.f32.partialorder %v342, 0.04
    %vm427 = vcmp.gt.f32.partialorder %v343, 0.04
    %vm428 = vcmp.gt.f32.partialorder %v344, 0.04
    %vm429 = vcmp.gt.f32.partialorder %v345, 0.04
    %vm430 = vcmp.gt.f32.partialorder %v346, 0.04
    %vm431 = vcmp.gt.f32.partialorder %v347, 0.04
    %vm432 = vcmp.gt.f32.partialorder %v348, 0.04
    %vm433 = vmand %vm401, %vm417
    %vm434 = vmand %vm402, %vm418
    %vm435 = vmand %vm403, %vm419
    %vm436 = vmand %vm404, %vm420
    %vm437 = vmand %vm405, %vm421
    %vm438 = vmand %vm406, %vm422
    %vm439 = vmand %vm407, %vm423
    %vm440 = vmand %vm408, %vm424
    %vm441 = vmand %vm409, %vm425
    %vm442 = vmand %vm410, %vm426
    %vm443 = vmand %vm411, %vm427
    %vm444 = vmand %vm412, %vm428
    %vm445 = vmand %vm413, %vm429
    %vm446 = vmand %vm414, %vm430
    %vm447 = vmand %vm415, %vm431
    %vm448 = vmand %vm416, %vm432
    %vm449 = vmxor %vm401, 1
    %vm450 = vmxor %vm402, 1
    %vm451 = vmxor %vm403, 1
    %vm452 = vmxor %vm404, 1
    %vm453 = vmxor %vm405, 1
    %vm454 = vmxor %vm406, 1
    %vm455 = vmxor %vm407, 1
    %vm456 = vmxor %vm408, 1
    %vm457 = vmxor %vm409, 1
    %vm458 = vmxor %vm410, 1
    %vm459 = vmxor %vm411, 1
    %vm460 = vmxor %vm412, 1
    %vm461 = vmxor %vm413, 1
    %vm462 = vmxor %vm414, 1
    %vm463 = vmxor %vm415, 1
    %vm464 = vmxor %vm416, 1
    %vm465 = vcmp.lt.f32.partialorder %v333, 0.64
    %vm466 = vcmp.lt.f32.partialorder %v334, 0.64
    %vm467 = vcmp.lt.f32.partialorder %v335, 0.64
    %vm468 = vcmp.lt.f32.partialorder %v336, 0.64
    %vm469 = vcmp.lt.f32.partialorder %v337, 0.64
    %vm470 = vcmp.lt.f32.partialorder %v338, 0.64
    %vm471 = vcmp.lt.f32.partialorder %v339, 0.64
    %vm472 = vcmp.lt.f32.partialorder %v340, 0.64
    %vm473 = vcmp.lt.f32.partialorder %v341, 0.64
    %vm474 = vcmp.lt.f32.partialorder %v342, 0.64
    %vm475 = vcmp.lt.f32.partialorder %v343, 0.64
    %vm476 = vcmp.lt.f32.partialorder %v344, 0.64
    %vm477 = vcmp.lt.f32.partialorder %v345, 0.64
    %vm478 = vcmp.lt.f32.partialorder %v346, 0.64
    %vm479 = vcmp.lt.f32.partialorder %v347, 0.64
    %vm480 = vcmp.lt.f32.partialorder %v348, 0.64
    %vm481 = vmand %vm449, %vm465
    %vm482 = vmand %vm450, %vm466
    %vm483 = vmand %vm451, %vm467
    %vm484 = vmand %vm452, %vm468
    %vm485 = vmand %vm453, %vm469
    %vm486 = vmand %vm454, %vm470
    %vm487 = vmand %vm455, %vm471
    %vm488 = vmand %vm456, %vm472
    %vm489 = vmand %vm457, %vm473
    %vm490 = vmand %vm458, %vm474
    %vm491 = vmand %vm459, %vm475
    %vm492 = vmand %vm460, %vm476
    %vm493 = vmand %vm461, %vm477
    %vm494 = vmand %vm462, %vm478
    %vm495 = vmand %vm463, %vm479
    %vm496 = vmand %vm464, %vm480
    %v497 = vsel %vm433, 1, 0
    %v498 = vsel %vm434, 1, 0
    %v499 = vsel %vm435, 1, 0
    %v500 = vsel %vm436, 1, 0
    %v501 = vsel %vm437, 1, 0
    %v502 = vsel %vm438, 1, 0
    %v503 = vsel %vm439, 1, 0
    %v504 = vsel %vm440, 1, 0
    %v505 = vsel %vm441, 1, 0
    %v506 = vsel %vm442, 1, 0
    %v507 = vsel %vm443, 1, 0
    %v508 = vsel %vm444, 1, 0
    %v509 = vsel %vm445, 1, 0
    %v510 = vsel %vm446, 1, 0
    %v511 = vsel %vm447, 1, 0
    %v512 = vsel %vm448, 1, 0
    %v513 = vsel %vm481, 1, 0
    %v514 = vsel %vm482, 1, 0
    %v515 = vsel %vm483, 1, 0
    %v516 = vsel %vm484, 1, 0
    %v517 = vsel %vm485, 1, 0
    %v518 = vsel %vm486, 1, 0
    %v519 = vsel %vm487, 1, 0
    %v520 = vsel %vm488, 1, 0
    %v521 = vsel %vm489, 1, 0
    %v522 = vsel %vm490, 1, 0
    %v523 = vsel %vm491, 1, 0
    %v524 = vsel %vm492, 1, 0
    %v525 = vsel %vm493, 1, 0
    %v526 = vsel %vm494, 1, 0
    %v527 = vsel %vm495, 1, 0
    %v528 = vsel %vm496, 1, 0
    %v529 = vshll.u32 %v513, 1
    %v530 = vshll.u32 %v514, 1
    %v531 = vshll.u32 %v515, 1
    %v532 = vshll.u32 %v516, 1
    %v533 = vshll.u32 %v517, 1
    %v534 = vshll.u32 %v518, 1
    %v535 = vshll.u32 %v519, 1
    %v536 = vshll.u32 %v520, 1
    %v537 = vshll.u32 %v521, 1
    %v538 = vshll.u32 %v522, 1
    %v539 = vshll.u32 %v523, 1
    %v540 = vshll.u32 %v524, 1
    %v541 = vshll.u32 %v525, 1
    %v542 = vshll.u32 %v526, 1
    %v543 = vshll.u32 %v527, 1
    %v544 = vshll.u32 %v528, 1
    %v545 = vor.u32 %v497, %v529
    %v546 = vor.u32 %v498, %v530
    %v547 = vor.u32 %v499, %v531
    %v548 = vor.u32 %v500, %v532
    %v549 = vor.u32 %v501, %v533
    %v550 = vor.u32 %v502, %v534
    %v551 = vor.u32 %v503, %v535
    %v552 = vor.u32 %v504, %v536
    %v553 = vor.u32 %v505, %v537
    %v554 = vor.u32 %v506, %v538
    %v555 = vor.u32 %v507, %v539
    %v556 = vor.u32 %v508, %v540
    %v557 = vor.u32 %v509, %v541
    %v558 = vor.u32 %v510, %v542
    %v559 = vor.u32 %v511, %v543
    %v560 = vor.u32 %v512, %v544
    %v561 = vpack.c.b16 %v546, %v545
    %v562 = vpack.c.b16 %v548, %v547
    %v563 = vpack.c.b8 %v562, %v561
    %v564 = vpack.c.b16 %v550, %v549
    %v565 = vpack.c.b16 %v552, %v551
    %v566 = vpack.c.b8 %v565, %v564
    %v567 = vpack.c.b16 %v554, %v553
    %v568 = vpack.c.b16 %v556, %v555
    %v569 = vpack.c.b8 %v568, %v567
    %v570 = vpack.c.b16 %v558, %v557
    %v571 = vpack.c.b16 %v560, %v559
    %v572 = vpack.c.b8 %v571, %v570
    %573 = vst [vmem:[#allocation2] sm:$0xff] %v563
    %574 = vst [vmem:[#allocation2 + $0x8] sm:$0xff] %v566
    %575 = vst [vmem:[#allocation2 + $0x10] sm:$0xff] %v569
    %576 = vst [vmem:[#allocation2 + $0x18] sm:$0xff] %v572
    %p577 = scmp.eq.s32.totalorder 0, 0
    // Predicated region
    $region18: #{tpu_custom_call.1} parent=1 // pred_check
      %p578 = pneg %p577
    $region19: #{tpu_custom_call.1} parent=1 // pred_check_branch
      %580 = sbr.rel (%p578) target = $region21
    $region20: #{tpu_custom_call.1} parent=1 // pred_region
      %v581 = vlaneseq
      %v582 = vshrl.u32 %v581, 7
      %v583 = vadd.s32 %v582, 8
      %v584 = vadd.s32 %v582, 16
      %v585 = vadd.s32 %v582, 24
      %v586 = vadd.s32 %v582, 32
      %v587 = vadd.s32 %v582, 40
      %v588 = vadd.s32 %v582, 48
      %v589 = vadd.s32 %v582, 56
      %v590 = vadd.s32 %v582, 64
      %v591 = vadd.s32 %v582, 72
      %v592 = vadd.s32 %v582, 80
      %v593 = vadd.s32 %v582, 88
      %v594 = vadd.s32 %v582, 96
      %v595 = vadd.s32 %v582, 104
      %v596 = vadd.s32 %v582, 112
      %v597 = vadd.s32 %v582, 120
      %v598 = vlaneseq
      %v599 = vand.u32 %v598, 127
      %vm600 = vcmp.eq.s32.totalorder %v582, %v599
      %vm601 = vcmp.eq.s32.totalorder %v583, %v599
      %vm602 = vcmp.eq.s32.totalorder %v584, %v599
      %vm603 = vcmp.eq.s32.totalorder %v585, %v599
      %vm604 = vcmp.eq.s32.totalorder %v586, %v599
      %vm605 = vcmp.eq.s32.totalorder %v587, %v599
      %vm606 = vcmp.eq.s32.totalorder %v588, %v599
      %vm607 = vcmp.eq.s32.totalorder %v589, %v599
      %vm608 = vcmp.eq.s32.totalorder %v590, %v599
      %vm609 = vcmp.eq.s32.totalorder %v591, %v599
      %vm610 = vcmp.eq.s32.totalorder %v592, %v599
      %vm611 = vcmp.eq.s32.totalorder %v593, %v599
      %vm612 = vcmp.eq.s32.totalorder %v594, %v599
      %vm613 = vcmp.eq.s32.totalorder %v595, %v599
      %vm614 = vcmp.eq.s32.totalorder %v596, %v599
      %vm615 = vcmp.eq.s32.totalorder %v597, %v599
      %vm616 = vmxor %vm600, 1
      %vm617 = vmxor %vm601, 1
      %vm618 = vmxor %vm602, 1
      %vm619 = vmxor %vm603, 1
      %vm620 = vmxor %vm604, 1
      %vm621 = vmxor %vm605, 1
      %vm622 = vmxor %vm606, 1
      %vm623 = vmxor %vm607, 1
      %vm624 = vmxor %vm608, 1
      %vm625 = vmxor %vm609, 1
      %vm626 = vmxor %vm610, 1
      %vm627 = vmxor %vm611, 1
      %vm628 = vmxor %vm612, 1
      %vm629 = vmxor %vm613, 1
      %vm630 = vmxor %vm614, 1
      %vm631 = vmxor %vm615, 1
      %vm632 = vmand %vm433, %vm616
      %vm633 = vmand %vm434, %vm617
      %vm634 = vmand %vm435, %vm618
      %vm635 = vmand %vm436, %vm619
      %vm636 = vmand %vm437, %vm620
      %vm637 = vmand %vm438, %vm621
      %vm638 = vmand %vm439, %vm622
      %vm639 = vmand %vm440, %vm623
      %vm640 = vmand %vm441, %vm624
      %vm641 = vmand %vm442, %vm625
      %vm642 = vmand %vm443, %vm626
      %vm643 = vmand %vm444, %vm627
      %vm644 = vmand %vm445, %vm628
      %vm645 = vmand %vm446, %vm629
      %vm646 = vmand %vm447, %vm630
      %vm647 = vmand %vm448, %vm631
      %v648 = vsel %vm632, 1, 0
      %v649 = vsel %vm633, 1, 0
      %v650 = vsel %vm634, 1, 0
      %v651 = vsel %vm635, 1, 0
      %v652 = vsel %vm636, 1, 0
      %v653 = vsel %vm637, 1, 0
      %v654 = vsel %vm638, 1, 0
      %v655 = vsel %vm639, 1, 0
      %v656 = vsel %vm640, 1, 0
      %v657 = vsel %vm641, 1, 0
      %v658 = vsel %vm642, 1, 0
      %v659 = vsel %vm643, 1, 0
      %v660 = vsel %vm644, 1, 0
      %v661 = vsel %vm645, 1, 0
      %v662 = vsel %vm646, 1, 0
      %v663 = vsel %vm647, 1, 0
      %v664 = vor.u32 %v648, %v529
      %v665 = vor.u32 %v649, %v530
      %v666 = vor.u32 %v650, %v531
      %v667 = vor.u32 %v651, %v532
      %v668 = vor.u32 %v652, %v533
      %v669 = vor.u32 %v653, %v534
      %v670 = vor.u32 %v654, %v535
      %v671 = vor.u32 %v655, %v536
      %v672 = vor.u32 %v656, %v537
      %v673 = vor.u32 %v657, %v538
      %v674 = vor.u32 %v658, %v539
      %v675 = vor.u32 %v659, %v540
      %v676 = vor.u32 %v660, %v541
      %v677 = vor.u32 %v661, %v542
      %v678 = vor.u32 %v662, %v543
      %v679 = vor.u32 %v663, %v544
      %v680 = vpack.c.b16 %v665, %v664
      %v681 = vpack.c.b16 %v667, %v666
      %v682 = vpack.c.b8 %v681, %v680
      %v683 = vpack.c.b16 %v669, %v668
      %v684 = vpack.c.b16 %v671, %v670
      %v685 = vpack.c.b8 %v684, %v683
      %v686 = vpack.c.b16 %v673, %v672
      %v687 = vpack.c.b16 %v675, %v674
      %v688 = vpack.c.b8 %v687, %v686
      %v689 = vpack.c.b16 %v677, %v676
      %v690 = vpack.c.b16 %v679, %v678
      %v691 = vpack.c.b8 %v690, %v689
      %692 = vst [vmem:[#allocation2] sm:$0xff] %v682
      %693 = vst [vmem:[#allocation2 + $0x8] sm:$0xff] %v685
      %694 = vst [vmem:[#allocation2 + $0x10] sm:$0xff] %v688
      %695 = vst [vmem:[#allocation2 + $0x18] sm:$0xff] %v691
    $region21: #{tpu_custom_call.1} parent=1 // pred_fallthru
      _
    // Predicated region
    $region22: #{tpu_custom_call.1} parent=1 // pred_check
      _
    $region23: #{tpu_custom_call.1} parent=1 // pred_check_branch
      %697 = sbr.rel (0) target = $region25
    $region24: #{tpu_custom_call.1} parent=1 // pred_region
      %s699 = ssub.s32 512, 512
      %700 = vsyncadd [#allocation3], %s699
      %s701 = sshll.u32 [#allocation2], 4
      %s702 = int_to_ptr.vmem [resolvable:$true] %s701
      %707 = dma.vmem_to_hbm [thread:$0]  %s702, 512, %s4, [#allocation3], 128, 128, 8
    $region25: #{tpu_custom_call.1} parent=1 // pred_fallthru
      _
    // Predicated region
    $region26: #{tpu_custom_call.1} parent=1 // pred_check
      _
    $region27: #{tpu_custom_call.1} parent=1 // pred_check_branch
      %709 = sbr.rel (0) target = $region29
    $region28: #{tpu_custom_call.1} parent=1 // pred_region
      %710 = dma.done [#allocation3], 512
    $region29: #{tpu_custom_call.1} parent=1 // pred_fallthru
      _
    %711 = vsyncpa [#allocation3], 1

</llo_original>
